<compile_context>
chip_gen: v5e
topology: v5e:2x2
jax: 0.10.0
libtpu: 0.0.40
codegen_flags: <defaults>
</compile_context>

<pallas_src>
import functools

import jax
import jax.numpy as jnp
from jax.experimental import pallas as pl
from jax.experimental.pallas import tpu as pltpu

# Points per tile -> lane axis.
TN = 256
# Voxel chunk of the flattened grid (lane-tile aligned slice; keeps every
# per-chunk [VC, TN] temporary register-resident instead of a [V, TN] spill).
VC = 128


def _round_up(x, m):
    return (x + m - 1) // m * m


# ----------------------------------------------------------------------------
# Kernels (points on the lane axis)
# ----------------------------------------------------------------------------
def _init_kernel(xd_ref, a_ref, out_ref):
    """out row (i*3 + r) = (inv(tfs[bone_i]) @ [x, 1])_r   (points on lanes)."""
    xd = xd_ref[0]                         # [3, TN]
    A = a_ref[0]                           # [I*3, 4]
    x = xd[0:1, :]
    y = xd[1:2, :]
    z = xd[2:3, :]
    out_ref[0] = A[:, 0:1] * x + A[:, 1:2] * y + A[:, 2:3] * z + A[:, 3:4]


def _hat(idx, u):
    """Trilinear tent weight of integer grid index `idx` for coordinate `u`."""
    return jnp.maximum(1.0 - jnp.abs(idx - u), 0.0)


def _dhat(idx, u):
    """d/du of the tent weight, matching the two-corner formulation exactly:
    -1 on the floor corner (d in (-1, 0]) and +1 on the ceil corner (d in (0, 1])."""
    d = idx - u
    pos = jnp.where((d > 0.0) & (d <= 1.0), 1.0, 0.0)
    neg = jnp.where((d <= 0.0) & (d > -1.0), 1.0, 0.0)
    return pos - neg


def _interp_weights(xc, grid_ref, vidx_ref, extend, cx, cy, cz, GD, GH, GW,
                    with_grad):
    """Trilinear grid_sample weights (border padding, align_corners=False).

    xc:       [3, TN]  canonical points, lane-dense.
    grid_ref: [J, V]   flattened weight grid ref, voxel v = z*GH*GW + y*GW + x.
    vidx_ref: [V, 3]   f32 (z, y, x) integer index of every voxel (host table).

    Separable tent-weight formulation: for every voxel chunk the [VC, TN]
    weight matrix kz*ky*kx is built with a handful of VPU ops and immediately
    contracted on the MXU into tiny [J, TN] accumulators.  Only valid voxel
    indices are ever touched, so no out-of-range masking is needed, and the
    clipped coordinates reproduce torch's padding_mode='border' exactly.
    """
    f32 = jnp.float32
    J, V = grid_ref.shape
    TNl = xc.shape[1]

    x = xc[0:1, :]
    y = xc[1:2, :]
    z = xc[2:3, :]
    # inv_transform_v: ((x - center) / extend) * 2  -> normalized grid coords
    gx = (x - cx) / extend * 2.0
    gy = (y - cy) / extend * 2.0
    gz = (z - cz) / extend * 2.0
    # unnormalize (align_corners=False): gx -> W axis, gy -> H, gz -> D
    ux = ((gx + 1.0) * GW - 1.0) * 0.5
    uy = ((gy + 1.0) * GH - 1.0) * 0.5
    uz = ((gz + 1.0) * GD - 1.0) * 0.5

    # border padding: clip + gradient multiplier (torch clip_coordinates_set_grad:
    # grad is zeroed when the *pre-clip* coordinate is <= 0 or >= size-1).
    mulx = jnp.where((ux > 0.0) & (ux < GW - 1.0), 1.0, 0.0).astype(f32)
    muly = jnp.where((uy > 0.0) & (uy < GH - 1.0), 1.0, 0.0).astype(f32)
    mulz = jnp.where((uz > 0.0) & (uz < GD - 1.0), 1.0, 0.0).astype(f32)
    ux = jnp.clip(ux, 0.0, GW - 1.0)
    uy = jnp.clip(uy, 0.0, GH - 1.0)
    uz = jnp.clip(uz, 0.0, GD - 1.0)

    vc = VC if V % VC == 0 else V
    w = jnp.zeros((J, TNl), f32)
    dws = [jnp.zeros((J, TNl), f32) for _ in range(3)] if with_grad else None

    for c0 in range(0, V, vc):
        zi = vidx_ref[c0:c0 + vc, 0:1]                      # [vc, 1]
        yi = vidx_ref[c0:c0 + vc, 1:2]
        xi = vidx_ref[c0:c0 + vc, 2:3]
        g_c = grid_ref[:, c0:c0 + vc]                       # [J, vc]
        kz = _hat(zi, uz)                                   # [vc, TN]
        ky = _hat(yi, uy)
        kx = _hat(xi, ux)
        kzy = kz * ky
        w = w + jnp.dot(g_c, kzy * kx, preferred_element_type=f32)
        if with_grad:
            dws[0] = dws[0] + jnp.dot(g_c, kzy * _dhat(xi, ux),
                                      preferred_element_type=f32)
            dws[1] = dws[1] + jnp.dot(g_c, (kz * _dhat(yi, uy)) * kx,
                                      preferred_element_type=f32)
            dws[2] = dws[2] + jnp.dot(g_c, (_dhat(zi, uz) * ky) * kx,
                                      preferred_element_type=f32)

    scales = None
    if with_grad:
        # du/dx = size/extend, zeroed where the border clip kicked in
        scales = (mulx * (GW / extend), muly * (GH / extend), mulz * (GD / extend))
    return w, dws, scales, (x, y, z)


def _apply_rows(T, x, y, z):
    """rows i of (T reshaped [4,4] per point) applied to [x, y, z, 1]; T: [16, TN]."""
    return [T[4 * i + 0:4 * i + 1] * x + T[4 * i + 1:4 * i + 2] * y
            + T[4 * i + 2:4 * i + 3] * z + T[4 * i + 3:4 * i + 4]
            for i in range(3)]


def _skin_fwd_kernel(xc_ref, grid_ref, vidx_ref, tfst_ref, xd_ref, *,
                     extend, cx, cy, cz, GD, GH, GW):
    xc = xc_ref[0]                    # [3, TN]
    tfst = tfst_ref[0]                # [16, J]
    w, _, _, (x, y, z) = _interp_weights(xc, grid_ref, vidx_ref, extend,
                                         cx, cy, cz, GD, GH, GW, False)
    T = jnp.dot(tfst, w, preferred_element_type=jnp.float32)     # [16, TN]
    xd_ref[0] = jnp.concatenate(_apply_rows(T, x, y, z), axis=0)


def _skin_jac_kernel(xc_ref, grid_ref, vidx_ref, tfst_ref, out_ref, *,
                     extend, cx, cy, cz, GD, GH, GW):
    f32 = jnp.float32
    xc = xc_ref[0]
    tfst = tfst_ref[0]
    w, dws, scales, (x, y, z) = _interp_weights(xc, grid_ref, vidx_ref, extend,
                                                cx, cy, cz, GD, GH, GW, True)
    TNl = w.shape[1]
    # merged K=J contraction: [16, J] x [J, 4*TN]  (amortises the MXU weight
    # load of the tiny-K matmul over 4x the output columns)
    TT = jnp.dot(tfst, jnp.concatenate([w] + dws, axis=1),
                 preferred_element_type=f32)                     # [16, 4*TN]
    T = TT[:, 0:TNl]
    xd_rows = _apply_rows(T, x, y, z)
    # jac row (3*i + m) = d xd_i / d xc_m
    jac_rows = [None] * 9
    for m in range(3):
        Tm = TT[:, (m + 1) * TNl:(m + 2) * TNl] * scales[m]
        cols = _apply_rows(Tm, x, y, z)
        for i in range(3):
            jac_rows[3 * i + m] = cols[i] + T[4 * i + m:4 * i + m + 1]
    # single [12, TN] output block: rows 0..2 = xd, rows 3..11 = jac (row major)
    out_ref[0] = jnp.concatenate(xd_rows + jac_rows, axis=0)


# ----------------------------------------------------------------------------
# Broyden root finder in the padded, lane-major [B, 3, Pp] layout (no per-
# iteration relayout between the solver math and the pallas kernels).
# ----------------------------------------------------------------------------
def broyden_lane(g, x_init, J_inv_init, max_steps=10, cvg_thresh=1e-5,
                 dvg_thresh=1.0, eps=1e-6):
    x = x_init                                   # [B, 3, P]
    J_inv = J_inv_init                           # [B, 3, 3, P]
    gx = g(x)                                    # [B, 3, P]
    update = -jnp.einsum('bijp,bjp->bip', J_inv, gx)
    x_opt = x
    gx_norm_opt = jnp.linalg.norm(gx, axis=1)    # [B, P]
    ids_val = jnp.ones_like(gx_norm_opt, dtype=bool)
    for _ in range(max_steps):
        delta_x = jnp.where(ids_val[:, None, :], update, 0.0)
        x = x + delta_x
        gx_new = g(x)
        delta_gx = jnp.where(ids_val[:, None, :], gx_new - gx, 0.0)
        gx = gx + delta_gx

        gx_norm = jnp.linalg.norm(gx, axis=1)
        ids_opt = gx_norm < gx_norm_opt
        gx_norm_opt = jnp.where(ids_opt, gx_norm, gx_norm_opt)
        x_opt = jnp.where(ids_opt[:, None, :], x, x_opt)
        ids_val = (gx_norm_opt > cvg_thresh) & (gx_norm < dvg_thresh)

        vT = jnp.einsum('bip,bijp->bjp', delta_x, J_inv)             # [B,3,P]
        denom = jnp.einsum('bjp,bjp->bp', vT, delta_gx) + eps        # [B,P]
        u = delta_x - jnp.einsum('bijp,bjp->bip', J_inv, delta_gx)   # [B,3,P]
        J_inv_new = J_inv + jnp.einsum('bip,bjp->bijp', u, vT) / denom[:, None, None, :]
        J_inv = jnp.where(ids_val[:, None, None, :], J_inv_new, J_inv)
        update = -jnp.einsum('bijp,bjp->bip', J_inv, gx)
    return {"result": x_opt, "diff": gx_norm_opt,
            "valid_ids": gx_norm_opt < cvg_thresh}


def _inv3x3_lane(jacT):
    """jacT: [B, 9, Pp] (row-major 3x3 per point) -> inverse in [B, 3, 3, Pp]."""
    B, _, Pp = jacT.shape
    m = jnp.transpose(jacT.reshape(B, 3, 3, Pp), (0, 3, 1, 2))   # [B, Pp, 3, 3]
    return jnp.transpose(jnp.linalg.inv(m), (0, 2, 3, 1))        # [B, 3, 3, Pp]


# ----------------------------------------------------------------------------
# Module
# ----------------------------------------------------------------------------
class ForwardDeformerDiffusedSkinning:
    """Synthetic-parameter JAX/Pallas port (no mesh / .pt loading)."""

    def __init__(self, weight_grid, bbox_grid_extend, bbox_grid_center):
        self.init_bones = [0, 1, 2, 4, 5, 16, 17, 18, 19]
        self.bbox_grid_extend = float(bbox_grid_extend)
        self.bbox_grid_center = tuple(float(c) for c in bbox_grid_center)
        self.weight_grid = weight_grid                     # [J, D, H, W]
        J, GD, GH, GW = weight_grid.shape
        self.grid_dims = (GD, GH, GW)
        V = GD * GH * GW
        # Lane-dense grid: [J, V] with V on the lane axis (v = z*GH*GW + y*GW + x).
        self.grid_t = weight_grid.reshape(J, V).astype(jnp.float32)
        # Host-precomputed (z, y, x) voxel index table -> no in-kernel iota/div.
        v = jnp.arange(V, dtype=jnp.int32)
        self.vidx = jnp.stack([v // (GH * GW), (v // GW) % GH, v % GW],
                              axis=1).astype(jnp.float32)          # [V, 3]

    # -------------------------------------------------- small helpers ------
    def _tfs_lane(self, tfs):
        B, J = tfs.shape[0], tfs.shape[1]
        return jnp.swapaxes(tfs.reshape(B, J, 16).astype(jnp.float32), 1, 2)  # [B,16,J]

    def _pad_lane(self, x):
        """[B, P, 3] -> padded lane-major [B, 3, Pp]."""
        B, P, _ = x.shape
        Pp = _round_up(P, TN)
        xT = jnp.swapaxes(x.astype(jnp.float32), 1, 2)
        return jnp.pad(xT, ((0, 0), (0, 0), (0, Pp - P)))

    # -------------------------------------------------- pallas wrappers ----
    def init(self, xd, tfs):
        B, N, _ = xd.shape
        I = len(self.init_bones)
        tfs_inv = jnp.linalg.inv(tfs)[:, jnp.asarray(self.init_bones)]   # [B,I,4,4]
        A = tfs_inv[:, :, :3, :].reshape(B, I * 3, 4).astype(jnp.float32)
        Pp = _round_up(N, TN)
        xdT = self._pad_lane(xd)                                         # [B,3,Pp]
        out = pl.pallas_call(
            _init_kernel,
            out_shape=jax.ShapeDtypeStruct((B, I * 3, Pp), jnp.float32),
            grid_spec=pltpu.PrefetchScalarGridSpec(
                num_scalar_prefetch=0, grid=(B, Pp // TN),
                in_specs=[pl.BlockSpec((1, 3, TN), lambda b, t: (b, 0, t)),
                          pl.BlockSpec((1, I * 3, 4), lambda b, t: (b, 0, 0))],
                out_specs=pl.BlockSpec((1, I * 3, TN), lambda b, t: (b, 0, t))),
            compiler_params=pltpu.CompilerParams(
                dimension_semantics=("parallel", "parallel")),
        )(xdT, A)
        return jnp.swapaxes(out, 1, 2)[:, :N].reshape(B, N, I, 3)

    def _skinning_padded(self, xcT, tfsT, with_jac):
        """xcT: [B, 3, Pp] (Pp multiple of TN), tfsT: [B, 16, J].

        Returns (xdT [B,3,Pp], jacT [B,9,Pp] or None), all lane-major."""
        B, _, Pp = xcT.shape
        GD, GH, GW = self.grid_dims
        J, V = self.grid_t.shape
        cx, cy, cz = self.bbox_grid_center
        common = dict(extend=self.bbox_grid_extend, cx=cx, cy=cy, cz=cz,
                      GD=GD, GH=GH, GW=GW)
        in_specs = [pl.BlockSpec((1, 3, TN), lambda b, t: (b, 0, t)),
                    pl.BlockSpec((J, V), lambda b, t: (0, 0)),
                    pl.BlockSpec((V, 3), lambda b, t: (0, 0)),
                    pl.BlockSpec((1, 16, J), lambda b, t: (b, 0, 0))]
        nrows = 12 if with_jac else 3
        kern = functools.partial(_skin_jac_kernel if with_jac else _skin_fwd_kernel,
                                 **common)
        out_shape = jax.ShapeDtypeStruct((B, nrows, Pp), jnp.float32)
        out_specs = pl.BlockSpec((1, nrows, TN), lambda b, t: (b, 0, t))

        n_steps = B * (Pp // TN)
        n_big = 4 if with_jac else 1
        flops = n_steps * (n_big * 2 * J * V * TN + 2 * 16 * J * n_big * TN
                           + 40 * V * TN)
        bytes_accessed = 4 * (xcT.size + self.grid_t.size + self.vidx.size
                              + tfsT.size + B * Pp * nrows)
        cost = pl.CostEstimate(flops=int(flops), transcendentals=0,
                               bytes_accessed=int(bytes_accessed))

        out = pl.pallas_call(
            kern, out_shape=out_shape,
            grid_spec=pltpu.PrefetchScalarGridSpec(
                num_scalar_prefetch=0, grid=(B, Pp // TN),
                in_specs=in_specs, out_specs=out_specs),
            compiler_params=pltpu.CompilerParams(
                dimension_semantics=("parallel", "parallel")),
            cost_estimate=cost,
        )(xcT, self.grid_t, self.vidx, tfsT)

        if with_jac:
            return out[:, :3], out[:, 3:]
        return out, None

    # ------------------------------------------------------- module API ----
    def forward_skinning(self, xc, cond, tfs, mask=None):
        B, P, _ = xc.shape
        xdT, _ = self._skinning_padded(self._pad_lane(xc), self._tfs_lane(tfs),
                                       with_jac=False)
        return jnp.swapaxes(xdT, 1, 2)[:, :P]

    def gradient(self, xc, cond, tfs):
        B, P, _ = xc.shape
        _, jacT = self._skinning_padded(self._pad_lane(xc), self._tfs_lane(tfs),
                                        with_jac=True)
        return jnp.swapaxes(jacT, 1, 2)[:, :P].reshape(B, P, 3, 3)

    def search(self, xd, xc_init, cond, tfs, eval_mode=False):
        B, N, I, D = xc_init.shape
        P = N * I
        Pp = _round_up(P, TN)
        tfsT = self._tfs_lane(tfs)

        # one-time relayout to the padded lane-major layout used by every
        # pallas_call inside the Broyden loop
        xcT = self._pad_lane(xc_init.reshape(B, P, D))                   # [B,3,Pp]
        xd_tgt = jnp.repeat(xd.astype(jnp.float32), I, axis=1)           # repeat_interleave
        xdT_tgt = self._pad_lane(xd_tgt)                                 # [B,3,Pp]

        if not eval_mode:
            _, jacT = self._skinning_padded(xcT, tfsT, with_jac=True)
            J_inv0 = _inv3x3_lane(jacT)                                  # [B,3,3,Pp]
        else:
            # TODO(synk): eval-mode Jacobian approx ((w @ tfs)[:, :, :3, :3])^-1 not implemented
            raise NotImplementedError("eval_mode=True branch not implemented")

        def _func(xT):
            xdT, _ = self._skinning_padded(xT, tfsT, with_jac=False)
            return xdT - xdT_tgt

        result = broyden_lane(_func, xcT, J_inv0, max_steps=10)
        xc_optT = result["result"]                                       # [B,3,Pp]
        xc_opt = jnp.swapaxes(xc_optT, 1, 2)[:, :P].reshape(B, N, I, D)
        others = {"result": xc_opt,
                  "valid_ids": result["valid_ids"][:, :P].reshape(B, N, I),
                  "diff": result["diff"][:, :P].reshape(B, N, I),
                  "xc_opt_lane": xc_optT}
        return xc_opt, others

    def forward(self, xd, cond, tfs, eval_mode=False):
        xc_init = self.init(xd, tfs)
        xc_opt, others = self.search(xd, xc_init, cond, tfs, eval_mode=eval_mode)
        if eval_mode:
            return xc_opt, others
        B, N, I, D = xc_init.shape
        P = N * I
        xc_optT = jax.lax.stop_gradient(others.pop("xc_opt_lane"))       # .detach()
        tfsT = self._tfs_lane(tfs)
        # single fused pass: the jac kernel already emits xd
        xdT_opt, jacT = self._skinning_padded(xc_optT, tfsT, with_jac=True)
        grad_inv = _inv3x3_lane(jacT)
        correction = xdT_opt - jax.lax.stop_gradient(xdT_opt)            # zero in value
        correction = -jnp.einsum('bijp,bjp->bip',
                                 jax.lax.stop_gradient(grad_inv), correction)
        xcT = xc_optT + correction
        xc = jnp.swapaxes(xcT, 1, 2)[:, :P].reshape(B, N, I, D)
        return xc, others


# ----------------------------------------------------------------------------
if __name__ == "__main__":
    key = jax.random.PRNGKey(0)
    B, N, J, I = 2, 40, 24, 9
    GD = GH = GW = 8
    k1, k2, k3, k4 = jax.random.split(key, 4)

    # deterministic synthetic parameters (replaces mesh / npy loading)
    weight_grid = jax.nn.softmax(
        jax.random.normal(k1, (J, GD, GH, GW), dtype=jnp.float32), axis=0)
    bbox_grid_extend = 2.2
    bbox_grid_center = (0.0, 0.1, 0.05)

    model = ForwardDeformerDiffusedSkinning(weight_grid, bbox_grid_extend,
                                            bbox_grid_center)

    # near-identity rigid-ish bone transforms -> well-conditioned Jacobians
    eye = jnp.eye(4, dtype=jnp.float32)
    tfs = jnp.tile(eye[None, None], (B, J, 1, 1))
    tfs = tfs.at[:, :, :3, :3].add(
        0.05 * jax.random.normal(k2, (B, J, 3, 3), dtype=jnp.float32))
    tfs = tfs.at[:, :, :3, 3].add(
        0.05 * jax.random.normal(k3, (B, J, 3), dtype=jnp.float32))

    center = jnp.asarray(bbox_grid_center, dtype=jnp.float32)
    xd = center + 0.3 * jax.random.normal(k4, (B, N, 3), dtype=jnp.float32)

    # ---- check 1: init kernel vs pure-JAX reference ----
    xc_init = model.init(xd, tfs)
    tfs_inv_sel = jnp.linalg.inv(tfs)[:, jnp.asarray(model.init_bones)]
    xh = jnp.concatenate([xd, jnp.ones((B, N, 1), jnp.float32)], axis=-1)
    xc_init_ref = jnp.einsum("birk,bnk->bnir", tfs_inv_sel[:, :, :3, :], xh,
                             precision=jax.lax.Precision.HIGHEST)
    assert jnp.allclose(xc_init, xc_init_ref, atol=1e-4), "init kernel mismatch"

    # ---- pure-JAX per-point reference (grid_sample + LBS) ----
    gridf = weight_grid.reshape(J, GD * GH * GW)

    def ref_point_fwd(p, tfs_b):
        g = (p - center) / bbox_grid_extend * 2.0
        ux = ((g[0] + 1.0) * GW - 1.0) * 0.5
        uy = ((g[1] + 1.0) * GH - 1.0) * 0.5
        uz = ((g[2] + 1.0) * GD - 1.0) * 0.5
        ux = jnp.clip(ux, 0.0, GW - 1.0)
        uy = jnp.clip(uy, 0.0, GH - 1.0)
        uz = jnp.clip(uz, 0.0, GD - 1.0)
        x0 = jnp.floor(ux); fx = ux - x0; ix0 = x0.astype(jnp.int32)
        y0 = jnp.floor(uy); fy = uy - y0; iy0 = y0.astype(jnp.int32)
        z0 = jnp.floor(uz); fz = uz - z0; iz0 = z0.astype(jnp.int32)
        w = jnp.zeros((J,), jnp.float32)
        for cz_ in (0, 1):
            for cy_ in (0, 1):
                for cx_ in (0, 1):
                    ix = ix0 + cx_; iy = iy0 + cy_; iz = iz0 + cz_
                    valid = (ix < GW) & (iy < GH) & (iz < GD)
                    wt = ((fz if cz_ else 1.0 - fz) * (fy if cy_ else 1.0 - fy)
                          * (fx if cx_ else 1.0 - fx))
                    idx = jnp.clip(iz * GH * GW + iy * GW + ix, 0, GD * GH * GW - 1)
                    w = w + jnp.where(valid, wt, 0.0) * gridf[:, idx]
        ph = jnp.concatenate([p, jnp.ones((1,), p.dtype)])
        T = jnp.einsum("j,jik->ik", w, tfs_b, precision=jax.lax.Precision.HIGHEST)
        return jnp.einsum("ik,k->i", T, ph, precision=jax.lax.Precision.HIGHEST)[:3]

    ref_fwd = jax.vmap(lambda pts, tb: jax.vmap(lambda p: ref_point_fwd(p, tb))(pts))
    ref_jac = jax.vmap(lambda pts, tb: jax.vmap(
        lambda p: jax.jacfwd(ref_point_fwd)(p, tb))(pts))

    xc_test = xc_init.reshape(B, N * I, 3)

    # ---- check 2: forward skinning kernel vs reference ----
    xd_k = model.forward_skinning(xc_test, {}, tfs)
    assert jnp.allclose(xd_k, ref_fwd(xc_test, tfs), atol=1e-3), "fwd skinning mismatch"

    # ---- check 3: analytical Jacobian kernel vs autodiff of the reference ----
    # (mask out the measure-zero set of points sitting on a voxel-cell boundary,
    #  where the piecewise-linear Jacobian is discontinuous)
    jac_k = model.gradient(xc_test, {}, tfs)
    jac_r = ref_jac(xc_test, tfs)

    def _unnorm(c, cc, G):
        g = (c - cc) / bbox_grid_extend * 2.0
        return ((g + 1.0) * G - 1.0) * 0.5
    uxs = _unnorm(xc_test[..., 0], center[0], GW)
    uys = _unnorm(xc_test[..., 1], center[1], GH)
    uzs = _unnorm(xc_test[..., 2], center[2], GD)

    def near_int(u):
        return jnp.abs(u - jnp.round(u)) < 1e-3
    safe = ~(near_int(uxs) | near_int(uys) | near_int(uzs))            # [B, P]
    jac_err = jnp.where(safe[..., None, None], jnp.abs(jac_k - jac_r), 0.0)
    assert bool(jnp.all(jac_err < 1e-3)), "jacobian mismatch"

    # ---- full forward pass (jitted so the Broyden pallas_calls schedule tightly) ----
    fwd = jax.jit(lambda xd_, tfs_: model.forward(xd_, {}, tfs_, eval_mode=False))
    xc, others = fwd(xd, tfs)
    xc = jax.block_until_ready(xc)
    assert xc.shape == (B, N, I, 3)
    assert bool(jnp.all(jnp.isfinite(xc)))
    print("KERNEL_OK")
</pallas_src>

<mosaic_0001>
module attributes {stable_mosaic.version = 11 : i64} {
  func.func @_init_kernel(%arg0: i32, %arg1: i32, %arg2: memref<1x3x256xf32, #tpu.memory_space<vmem>>, %arg3: memref<1x27x4xf32, #tpu.memory_space<vmem>>, %arg4: memref<1x27x256xf32, #tpu.memory_space<vmem>>) attributes {dimension_semantics = [#tpu.dimension_semantics<parallel>, #tpu.dimension_semantics<parallel>], iteration_bounds = array<i64: 2, 1>, scalar_prefetch = 0 : i64, scratch_operands = 0 : i64, tpu.core_type = #tpu.core_type<tc>, window_params = [{transform_indices = @transform_0, window_bounds = array<i64: 1, 3, 256>}, {transform_indices = @transform_1, window_bounds = array<i64: 1, 27, 4>}, {transform_indices = @transform_2, window_bounds = array<i64: 1, 27, 256>}]} {
    %c0 = arith.constant 0 : index
    %c0_0 = arith.constant 0 : index
    %c0_1 = arith.constant 0 : index
    %0 = vector.load %arg2[%c0, %c0_0, %c0_1] : memref<1x3x256xf32, #tpu.memory_space<vmem>>, vector<1x3x256xf32>
    %1 = vector.shape_cast %0 : vector<1x3x256xf32> to vector<3x256xf32>
    %c0_2 = arith.constant 0 : index
    %c0_3 = arith.constant 0 : index
    %c0_4 = arith.constant 0 : index
    %2 = vector.load %arg3[%c0_2, %c0_3, %c0_4] : memref<1x27x4xf32, #tpu.memory_space<vmem>>, vector<1x27x4xf32>
    %3 = vector.shape_cast %2 : vector<1x27x4xf32> to vector<27x4xf32>
    %4 = vector.extract_strided_slice %1 {offsets = [0, 0], sizes = [1, 256], strides = [1, 1]} : vector<3x256xf32> to vector<1x256xf32>
    %5 = vector.extract_strided_slice %1 {offsets = [1, 0], sizes = [1, 256], strides = [1, 1]} : vector<3x256xf32> to vector<1x256xf32>
    %6 = vector.extract_strided_slice %1 {offsets = [2, 0], sizes = [1, 256], strides = [1, 1]} : vector<3x256xf32> to vector<1x256xf32>
    %7 = vector.extract_strided_slice %3 {offsets = [0, 0], sizes = [27, 1], strides = [1, 1]} : vector<27x4xf32> to vector<27x1xf32>
    %8 = vector.broadcast %7 : vector<27x1xf32> to vector<27x256xf32>
    %9 = vector.broadcast %4 : vector<1x256xf32> to vector<27x256xf32>
    %10 = arith.mulf %8, %9 : vector<27x256xf32>
    %11 = vector.extract_strided_slice %3 {offsets = [0, 1], sizes = [27, 1], strides = [1, 1]} : vector<27x4xf32> to vector<27x1xf32>
    %12 = vector.broadcast %11 : vector<27x1xf32> to vector<27x256xf32>
    %13 = vector.broadcast %5 : vector<1x256xf32> to vector<27x256xf32>
    %14 = arith.mulf %12, %13 : vector<27x256xf32>
    %15 = arith.addf %10, %14 : vector<27x256xf32>
    %16 = vector.extract_strided_slice %3 {offsets = [0, 2], sizes = [27, 1], strides = [1, 1]} : vector<27x4xf32> to vector<27x1xf32>
    %17 = vector.broadcast %16 : vector<27x1xf32> to vector<27x256xf32>
    %18 = vector.broadcast %6 : vector<1x256xf32> to vector<27x256xf32>
    %19 = arith.mulf %17, %18 : vector<27x256xf32>
    %20 = arith.addf %15, %19 : vector<27x256xf32>
    %21 = vector.extract_strided_slice %3 {offsets = [0, 3], sizes = [27, 1], strides = [1, 1]} : vector<27x4xf32> to vector<27x1xf32>
    %22 = vector.broadcast %21 : vector<27x1xf32> to vector<27x256xf32>
    %23 = arith.addf %20, %22 : vector<27x256xf32>
    %c0_5 = arith.constant 0 : index
    %c0_6 = arith.constant 0 : index
    %c0_7 = arith.constant 0 : index
    %24 = vector.load %arg4[%c0_5, %c0_6, %c0_7] : memref<1x27x256xf32, #tpu.memory_space<vmem>>, vector<1x27x256xf32>
    %25 = vector.shape_cast %24 : vector<1x27x256xf32> to vector<27x256xf32>
    %26 = vector.shape_cast %23 : vector<27x256xf32> to vector<1x27x256xf32>
    tpu.vector_store %arg4[%c0_5, %c0_6, %c0_7], %26 {strides = array<i32>} : memref<1x27x256xf32, #tpu.memory_space<vmem>>, vector<1x27x256xf32>,
    return
  }
  func.func @transform_0(%arg0: i32, %arg1: i32) -> (i32, i32, i32) {
    %c0_i32 = arith.constant 0 : i32
    %c0_i32_0 = arith.constant 0 : i32
    return %arg0, %c0_i32, %arg1 : i32, i32, i32
  }
  func.func @transform_1(%arg0: i32, %arg1: i32) -> (i32, i32, i32) {
    %c0_i32 = arith.constant 0 : i32
    %c0_i32_0 = arith.constant 0 : i32
    %c0_i32_1 = arith.constant 0 : i32
    return %arg0, %c0_i32, %c0_i32_0 : i32, i32, i32
  }
  func.func @transform_2(%arg0: i32, %arg1: i32) -> (i32, i32, i32) {
    %c0_i32 = arith.constant 0 : i32
    %c0_i32_0 = arith.constant 0 : i32
    return %arg0, %c0_i32, %arg1 : i32, i32, i32
  }
}

</mosaic_0001>

<llo_original>
// kernel: tpu_custom_call.1
$region0: #{tpu_custom_call.1}
  #allocation0 [shape = 'u32[]', space=smem, size = 0x4, offset = 0x4, fixed_abs, tag = 'smem constant byte address 0x4 - core index']
  #allocation1 [shape = 'u32[72,128]{1,0:T(1,128)}', space=vmem, size = 0x9000, scoped, tag = 'internal scratch']
  %s0 = inlined_call_operand.vmem [shape: f32[2,3,256], index: 0, kind: input, shape index: {}]
  %s1 = inlined_call_operand.vmem [shape: f32[2,27,4], index: 1, kind: input, shape index: {}]
  %s2 = inlined_call_operand.vmem [shape: f32[2,27,256], index: 2, kind: output, shape index: {}]
  %s3 = sld [smem:[#allocation0]]
  $region41: #{tpu_custom_call.1} parent=0
    _
  %s5 = ssub.s32 1, %s3
  %s6 = scalar_select 0, %s5, %s3
  loop: start=0, step=1, limit=4
  $region2: #{tpu_custom_call.1} parent=0 // loop_pre_header
    _
  $region3: #{tpu_custom_call.1} parent=0 // loop_header
    %s8 = sphi 0, %s12
    %p9 = scmp.ge.s32.totalorder %s8, 4
    %s15 = sphi 0, %s27
    %s16 = sphi 0, %s23
    %s17 = sphi 0, %s15
    %s18 = sphi 0, %s16
    %s19 = sphi 0, %s17
    %s20 = sphi 0, %s18
    %s32 = sphi 0, %s34
    %s35 = sphi 0, %s32
    %s36 = sphi 0, %s35
    %s52 = sphi 0, %s36
    %s58 = sphi 0, %s60
    %s61 = sphi 0, %s58
    %s62 = sphi 0, %s61
    %s78 = sphi 0, %s62
    %s86 = sphi 0, %s88
    %s89 = sphi 0, %s86
    %s90 = sphi 0, %s89
    %s106 = sphi 0, %s90
  $region4: #{tpu_custom_call.1} parent=0 // loop_header_branch
    %11 = sbr.rel (%p9) target = $region8
  $region5: #{tpu_custom_call.1} parent=0 // loop_body
    %s13 = ssub.s32 %s8, 1
    %s14 = ssub.s32 %s8, 2
    %s21 = sadd.s32 1, %s16
    %p22 = scmp.ge.s32.totalorder %s21, 1
    %s23 = scalar_select %p22, 0, %s21
    %s24 = sadd.s32 1, %s15
    %s25 = scalar_select %p22, %s24, %s15
    %p26 = scmp.ge.s32.totalorder %s25, 2
    %s27 = scalar_select %p26, 0, %s25
    %s28 = ssub.s32 %s15, %s27
    %s29 = ssub.s32 %s16, %s23
    %s30 = sor.u32 %s28, %s29
    %p31 = scmp.eq.s32.totalorder %s30, 0
    %s33 = sadd.s32 %s32, 1
    %s34 = scalar_select %p31, %s32, %s33
    %p37 = pneg %p31
    %p38 = scmp.eq.s32.totalorder %s8, 1
    %p39 = por %p37, %p38
    %p40 = scmp.ne.s32.totalorder %s32, %s35
    %p41 = scmp.eq.s32.totalorder %s8, 0
    %p42 = por %p40, %p41
    %p43 = scmp.ne.s32.totalorder %s32, %s35
    %p44 = scmp.eq.s32.totalorder %s13, 1
    %p45 = por %p43, %p44
    %p46 = scmp.ne.s32.totalorder %s35, %s36
    %p47 = scmp.eq.s32.totalorder %s13, 0
    %p48 = por %p46, %p47
    %p49 = scmp.ne.s32.totalorder %s35, %s36
    %p50 = scmp.eq.s32.totalorder %s14, 1
    %p51 = por %p49, %p50
    %p53 = scmp.ne.s32.totalorder %s36, %s52
    %p54 = scmp.eq.s32.totalorder %s14, 0
    %p55 = por %p53, %p54
    %s56 = ssub.s32 %s15, %s27
    %p57 = scmp.eq.s32.totalorder %s56, 0
    %s59 = sadd.s32 %s58, 1
    %s60 = scalar_select %p57, %s58, %s59
    %p63 = pneg %p57
    %p64 = scmp.eq.s32.totalorder %s8, 1
    %p65 = por %p63, %p64
    %p66 = scmp.ne.s32.totalorder %s58, %s61
    %p67 = scmp.eq.s32.totalorder %s8, 0
    %p68 = por %p66, %p67
    %p69 = scmp.ne.s32.totalorder %s58, %s61
    %p70 = scmp.eq.s32.totalorder %s13, 1
    %p71 = por %p69, %p70
    %p72 = scmp.ne.s32.totalorder %s61, %s62
    %p73 = scmp.eq.s32.totalorder %s13, 0
    %p74 = por %p72, %p73
    %p75 = scmp.ne.s32.totalorder %s61, %s62
    %p76 = scmp.eq.s32.totalorder %s14, 1
    %p77 = por %p75, %p76
    %p79 = scmp.ne.s32.totalorder %s62, %s78
    %p80 = scmp.eq.s32.totalorder %s14, 0
    %p81 = por %p79, %p80
    %s82 = ssub.s32 %s15, %s27
    %s83 = ssub.s32 %s16, %s23
    %s84 = sor.u32 %s82, %s83
    %p85 = scmp.eq.s32.totalorder %s84, 0
    %s87 = sadd.s32 %s86, 1
    %s88 = scalar_select %p85, %s86, %s87
    %p91 = pneg %p85
    %p92 = scmp.eq.s32.totalorder %s8, 1
    %p93 = por %p91, %p92
    %p94 = scmp.ne.s32.totalorder %s86, %s89
    %p95 = scmp.eq.s32.totalorder %s8, 0
    %p96 = por %p94, %p95
    %p97 = scmp.ne.s32.totalorder %s86, %s89
    %p98 = scmp.eq.s32.totalorder %s13, 1
    %p99 = por %p97, %p98
    %p100 = scmp.ne.s32.totalorder %s89, %s90
    %p101 = scmp.eq.s32.totalorder %s13, 0
    %p102 = por %p100, %p101
    %p103 = scmp.ne.s32.totalorder %s89, %s90
    %p104 = scmp.eq.s32.totalorder %s14, 1
    %p105 = por %p103, %p104
    %p107 = scmp.ne.s32.totalorder %s90, %s106
    %p108 = scmp.eq.s32.totalorder %s14, 0
    %p109 = por %p107, %p108
    %p110 = scmp.le.s32.totalorder 1, %s8
    %p111 = scmp.lt.s32.totalorder %s8, 3
    %p112 = pnand %p110, %p111
    %p113 = pneg %p112
    // Predicated region
    $region9: #{tpu_custom_call.1} parent=5 // pred_check
      _
    $region10: #{tpu_custom_call.1} parent=5 // pred_check_branch
      %115 = sbr.rel (%p112) target = $region12
    $region11: #{tpu_custom_call.1} parent=5 // pred_region
      %s116 = ssub.s32 %s8, 1
    $region12: #{tpu_custom_call.1} parent=5 // pred_fallthru
      _
    %p117 = scmp.lt.s32.totalorder %s8, 2
    // Predicated region
    $region13: #{tpu_custom_call.1} parent=5 // pred_check
      %p118 = pneg %p117
    $region14: #{tpu_custom_call.1} parent=5 // pred_check_branch
      %120 = sbr.rel (%p118) target = $region16
    $region15: #{tpu_custom_call.1} parent=5 // pred_region
      // Predicated region
      $region17: #{tpu_custom_call.1} parent=15 // pred_check
        %p121 = pneg %p42
      $region18: #{tpu_custom_call.1} parent=15 // pred_check_branch
        %123 = sbr.rel (%p121) target = $region20
      $region19: #{tpu_custom_call.1} parent=15 // pred_region
        %s124 = smul.u32 2, %s16
        %p125 = scmp.lt.s32.totalorder %s15, 1
        %s126 = scalar_select %p125, %s15, 1
        %p127 = scmp.lt.s32.totalorder %s124, 1
        %s128 = scalar_select %p127, %s124, 1
        %s129 = smul.addr %s126, 2
        %s130 = sadd.s32 %s128, %s129
        %s131 = smul.addr %s130, 4
        %s132 = scalar_lea.vmem %s0, %s131
        %s133 = smul.u32 2, %s16
      $region20: #{tpu_custom_call.1} parent=15 // pred_fallthru
        _
      // Predicated region
      $region21: #{tpu_custom_call.1} parent=15 // pred_check
        %p134 = pneg %p68
      $region22: #{tpu_custom_call.1} parent=15 // pred_check_branch
        %136 = sbr.rel (%p134) target = $region24
      $region23: #{tpu_custom_call.1} parent=15 // pred_region
        %p137 = scmp.lt.s32.totalorder %s15, 1
        %s138 = scalar_select %p137, %s15, 1
        %s139 = smul.addr %s138, 4
        %s140 = smul.addr %s139, 8
        %s141 = scalar_lea.vmem %s1, %s140
      $region24: #{tpu_custom_call.1} parent=15 // pred_fallthru
        _
    $region16: #{tpu_custom_call.1} parent=5 // pred_fallthru
      _
    %p142 = scmp.le.s32.totalorder 1, %s8
    %p143 = scmp.lt.s32.totalorder %s8, 3
    %p144 = pnand %p142, %p143
    %p145 = pneg %p144
    // Predicated region
    $region25: #{tpu_custom_call.1} parent=5 // pred_check
      _
    $region26: #{tpu_custom_call.1} parent=5 // pred_check_branch
      %147 = sbr.rel (%p144) target = $region28
    $region27: #{tpu_custom_call.1} parent=5 // pred_region
      %s148 = ssub.s32 %s8, 1
      %s149 = smul.u32 2, %s18
      %p150 = scmp.lt.s32.totalorder %s17, 1
      %s151 = scalar_select %p150, %s17, 1
      %p152 = scmp.lt.s32.totalorder %s149, 1
      %s153 = scalar_select %p152, %s149, 1
      %s154 = smul.addr %s151, 2
      %s155 = sadd.s32 %s153, %s154
      %s156 = smul.addr %s155, 4
      %s157 = scalar_lea.vmem %s0, %s156
      %p158 = pneg %p48
      %p159 = pneg %p45
      %p160 = scmp.lt.s32.totalorder %s17, 1
      %s161 = scalar_select %p160, %s17, 1
      %s162 = smul.addr %s161, 4
      %s163 = smul.addr %s162, 8
      %s164 = scalar_lea.vmem %s1, %s163
      %p165 = pneg %p74
      %p166 = pneg %p71
      %p167 = pneg %p102
      %p168 = pneg %p99
      %s169 = smul.u32 2, %s18
      %p170 = scmp.lt.s32.totalorder %s17, 1
      %s171 = scalar_select %p170, %s17, 1
      %p172 = scmp.lt.s32.totalorder %s169, 1
      %s173 = scalar_select %p172, %s169, 1
      %s174 = smul.addr %s171, 8
      %s175 = sadd.s32 %s173, %s174
      %s176 = smul.addr %s175, 8
      %s177 = scalar_lea.vmem %s2, %s176
      %s178 = smul.u32 2, %s18
      %p179 = scmp.lt.s32.totalorder %s17, 1
      %s180 = scalar_select %p179, %s17, 1
      %p181 = scmp.lt.s32.totalorder %s178, 1
      %s182 = scalar_select %p181, %s178, 1
      %s183 = smul.addr %s180, 2
      %s184 = sadd.s32 %s182, %s183
      %s185 = smul.addr %s184, 4
      %s186 = scalar_lea.vmem %s0, %s185
      %s187 = smul.u32 2, %s18
      %p188 = scmp.lt.s32.totalorder %s17, 1
      %s189 = scalar_select %p188, %s17, 1
      %s190 = smul.addr %s189, 4
      %s191 = smul.addr %s190, 8
      %s192 = scalar_lea.vmem %s1, %s191
      %s193 = smul.u32 2, %s18
      %p194 = scmp.lt.s32.totalorder %s17, 1
      %s195 = scalar_select %p194, %s17, 1
      %p196 = scmp.lt.s32.totalorder %s193, 1
      %s197 = scalar_select %p196, %s193, 1
      %s198 = smul.addr %s195, 8
      %s199 = sadd.s32 %s197, %s198
      %s200 = smul.addr %s199, 8
      %s201 = scalar_lea.vmem %s2, %s200
      %s202 = smul.u32 2, %s18
      %v203 = vld [vmem:[%s186] sm:$0x77]
      %v204 = vld [vmem:[%s192] sm:$0xff]
      %v205 = vld [vmem:[%s192 + $0x8] sm:$0xff]
      %v206 = vld [vmem:[%s192 + $0x10] sm:$0xff]
      %v207 = vld [vmem:[%s192 + $0x18] sm:$0x7]
      %209 = vset.pattern.permute.xlu0 0
      %210 = vperm.xlu0 %209, %v204
      %v211 = vpop.permute.xlu0 %210
      %214 = vset.pattern.permute.xlu0 0
      %215 = vperm.xlu0 %214, %v205
      %v216 = vpop.permute.xlu0 %215
      %219 = vset.pattern.permute.xlu0 0
      %220 = vperm.xlu0 %219, %v206
      %v221 = vpop.permute.xlu0 %220
      %224 = vset.pattern.permute.xlu0 0
      %225 = vperm.xlu0 %224, %v207
      %v226 = vpop.permute.xlu0 %225
      %v229 = vperm.slane %v203, 0
      %v230 = vperm.slane %v203, 4
      %v233 = vperm.slane %v229, 0
      %v234 = vperm.slane %v230, 0
      %v235 = vmul.f32 %v211, %v233
      %v236 = vmul.f32 %v211, %v234
      %v237 = vmul.f32 %v216, %v233
      %v238 = vmul.f32 %v216, %v234
      %v239 = vmul.f32 %v221, %v233
      %v240 = vmul.f32 %v221, %v234
      %v241 = vmul.f32 %v226, %v233
      %v242 = vmul.f32 %v226, %v234
      %243 = vset.pattern.permute.xlu0 1
      %244 = vperm.xlu0 %243, %v204
      %v245 = vpop.permute.xlu0 %244
      %247 = vset.pattern.permute.xlu0 1
      %248 = vperm.xlu0 %247, %v205
      %v249 = vpop.permute.xlu0 %248
      %251 = vset.pattern.permute.xlu0 1
      %252 = vperm.xlu0 %251, %v206
      %v253 = vpop.permute.xlu0 %252
      %255 = vset.pattern.permute.xlu0 1
      %256 = vperm.xlu0 %255, %v207
      %v257 = vpop.permute.xlu0 %256
      %v259 = vperm.slane %v203, 1
      %v260 = vperm.slane %v203, 5
      %v263 = vperm.slane %v259, 1
      %v264 = vperm.slane %v260, 1
      %v265 = vmul.f32 %v245, %v263
      %v266 = vmul.f32 %v245, %v264
      %v267 = vmul.f32 %v249, %v263
      %v268 = vmul.f32 %v249, %v264
      %v269 = vmul.f32 %v253, %v263
      %v270 = vmul.f32 %v253, %v264
      %v271 = vmul.f32 %v257, %v263
      %v272 = vmul.f32 %v257, %v264
      %v273 = vadd.f32 %v235, %v265
      %v274 = vadd.f32 %v236, %v266
      %v275 = vadd.f32 %v237, %v267
      %v276 = vadd.f32 %v238, %v268
      %v277 = vadd.f32 %v239, %v269
      %v278 = vadd.f32 %v240, %v270
      %v279 = vadd.f32 %v241, %v271
      %v280 = vadd.f32 %v242, %v272
      %281 = vset.pattern.permute.xlu0 2
      %282 = vperm.xlu0 %281, %v204
      %v283 = vpop.permute.xlu0 %282
      %285 = vset.pattern.permute.xlu0 2
      %286 = vperm.xlu0 %285, %v205
      %v287 = vpop.permute.xlu0 %286
      %289 = vset.pattern.permute.xlu0 2
      %290 = vperm.xlu0 %289, %v206
      %v291 = vpop.permute.xlu0 %290
      %293 = vset.pattern.permute.xlu0 2
      %294 = vperm.xlu0 %293, %v207
      %v295 = vpop.permute.xlu0 %294
      %v297 = vperm.slane %v203, 2
      %v298 = vperm.slane %v203, 6
      %v301 = vperm.slane %v297, 2
      %v302 = vperm.slane %v298, 2
      %v303 = vmul.f32 %v283, %v301
      %v304 = vmul.f32 %v283, %v302
      %v305 = vmul.f32 %v287, %v301
      %v306 = vmul.f32 %v287, %v302
      %v307 = vmul.f32 %v291, %v301
      %v308 = vmul.f32 %v291, %v302
      %v309 = vmul.f32 %v295, %v301
      %v310 = vmul.f32 %v295, %v302
      %v311 = vadd.f32 %v273, %v303
      %v312 = vadd.f32 %v274, %v304
      %v313 = vadd.f32 %v275, %v305
      %v314 = vadd.f32 %v276, %v306
      %v315 = vadd.f32 %v277, %v307
      %v316 = vadd.f32 %v278, %v308
      %v317 = vadd.f32 %v279, %v309
      %v318 = vadd.f32 %v280, %v310
      %319 = vset.pattern.permute.xlu0 3
      %320 = vperm.xlu0 %319, %v204
      %v321 = vpop.permute.xlu0 %320
      %323 = vset.pattern.permute.xlu0 3
      %324 = vperm.xlu0 %323, %v205
      %v325 = vpop.permute.xlu0 %324
      %327 = vset.pattern.permute.xlu0 3
      %328 = vperm.xlu0 %327, %v206
      %v329 = vpop.permute.xlu0 %328
      %331 = vset.pattern.permute.xlu0 3
      %332 = vperm.xlu0 %331, %v207
      %v333 = vpop.permute.xlu0 %332
      %v335 = vadd.f32 %v311, %v321
      %v336 = vadd.f32 %v312, %v321
      %v337 = vadd.f32 %v313, %v325
      %v338 = vadd.f32 %v314, %v325
      %v339 = vadd.f32 %v315, %v329
      %v340 = vadd.f32 %v316, %v329
      %v341 = vadd.f32 %v317, %v333
      %v342 = vadd.f32 %v318, %v333
      %343 = vst [vmem:[%s201] sm:$0xff] %v335
      %344 = vst [vmem:[%s201 + $0x8] sm:$0xff] %v336
      %345 = vst [vmem:[%s201 + $0x10] sm:$0xff] %v337
      %346 = vst [vmem:[%s201 + $0x18] sm:$0xff] %v338
      %347 = vst [vmem:[%s201 + $0x20] sm:$0xff] %v339
      %348 = vst [vmem:[%s201 + $0x28] sm:$0xff] %v340
      %349 = vst [vmem:[%s201 + $0x30] sm:$0x7] %v341
      %350 = vst [vmem:[%s201 + $0x38] sm:$0x7] %v342
      %s351 = smul.u32 2, %s18
      %p352 = scmp.lt.s32.totalorder %s17, 1
      %s353 = scalar_select %p352, %s17, 1
      %p354 = scmp.lt.s32.totalorder %s351, 1
      %s355 = scalar_select %p354, %s351, 1
      %s356 = smul.addr %s353, 8
      %s357 = sadd.s32 %s355, %s356
      %s358 = smul.addr %s357, 8
      %s359 = scalar_lea.vmem %s2, %s358
      // Predicated region
      $region29: #{tpu_custom_call.1} parent=27 // pred_check
        %p360 = pneg %p99
      $region30: #{tpu_custom_call.1} parent=27 // pred_check_branch
        %362 = sbr.rel (%p360) target = $region32
      $region31: #{tpu_custom_call.1} parent=27 // pred_region
        %s363 = smul.u32 2, %s18
      $region32: #{tpu_custom_call.1} parent=27 // pred_fallthru
        _
    $region28: #{tpu_custom_call.1} parent=5 // pred_fallthru
      _
    %p364 = scmp.le.s32.totalorder 2, %s8
    // Predicated region
    $region33: #{tpu_custom_call.1} parent=5 // pred_check
      %p365 = pneg %p364
    $region34: #{tpu_custom_call.1} parent=5 // pred_check_branch
      %367 = sbr.rel (%p365) target = $region36
    $region35: #{tpu_custom_call.1} parent=5 // pred_region
      %s368 = ssub.s32 %s8, 2
      // Predicated region
      $region37: #{tpu_custom_call.1} parent=35 // pred_check
        %p369 = pneg %p105
      $region38: #{tpu_custom_call.1} parent=35 // pred_check_branch
        %371 = sbr.rel (%p369) target = $region40
      $region39: #{tpu_custom_call.1} parent=35 // pred_region
        %s372 = smul.u32 2, %s20
        %p373 = scmp.lt.s32.totalorder %s19, 1
        %s374 = scalar_select %p373, %s19, 1
        %p375 = scmp.lt.s32.totalorder %s372, 1
        %s376 = scalar_select %p375, %s372, 1
        %s377 = smul.addr %s374, 8
        %s378 = sadd.s32 %s376, %s377
        %s379 = smul.addr %s378, 8
        %s380 = scalar_lea.vmem %s2, %s379
      $region40: #{tpu_custom_call.1} parent=35 // pred_fallthru
        _
    $region36: #{tpu_custom_call.1} parent=5 // pred_fallthru
      _
  $region6: #{tpu_custom_call.1} parent=0 // loop_footer
    %s12 = sadd.s32 1, %s8
  $region7: #{tpu_custom_call.1} parent=0 // loop_footer_branch
    %7 = sbr.rel target = $region3
  $region8: #{tpu_custom_call.1} parent=0 // loop_exit
    _

</llo_original>
